<compile_context>
chip_gen: v7x
topology: tpu7x:2x2x1
jax: 0.10.0
libtpu: 0.0.40
codegen_flags: <defaults>
</compile_context>

<pallas_src>
import functools

import jax
import jax.numpy as jnp
from jax.experimental import pallas as pl
from jax.experimental.pallas import tpu as pltpu

_LANE = 128
_ROW_ALIGN = 16     # bf16 packs two rows per sublane -> align batch tiles to 16


def _round_up(n, m):
    return ((n + m - 1) // m) * m


def _predictor_kernel(x_ref, fw_ref, w1_ref, b1_ref, w2_ref, b2_ref, o_ref):
    # x * feature_weights in f32 (same rounding order as the reference), then
    # cast to the weight dtype for the MXU (f32 accumulation).
    xw = x_ref[...] * fw_ref[...]
    h = jnp.dot(xw.astype(w1_ref.dtype), w1_ref[...],
                preferred_element_type=jnp.float32) + b1_ref[...]
    h = jnp.maximum(h, 0.0)
    # dropout: identity in eval mode.
    # TODO(synk): training-mode stochastic dropout (pltpu.prng_*).
    y = jnp.dot(h.astype(w2_ref.dtype), w2_ref[...],
                preferred_element_type=jnp.float32) + b2_ref[...]
    o_ref[...] = y.astype(o_ref.dtype)


def prepare_predictor_params(feature_weights, w1, b1, w2, b2, output_scale=1.0,
                             compute_dtype=jnp.bfloat16):
    """One-time (model-load) weight prep, hoisted out of the per-call path.

    * output_scale folded into fc2 weight/bias (mathematically exact).
    * hidden (H) lane dim zero-padded to 128 so both matmuls see full MXU
      tiles and the intermediate activation is lane-dense.
    * weights cast to compute_dtype; biases kept f32 (added post-accumulate).
    * feature_weights kept separate in f32 and applied in-kernel (reference
      rounding order; avoids quantizing fw into bf16 weights).
    """
    D, H = w1.shape
    O = w2.shape[1]
    h_pad = _round_up(H, _LANE)

    fw_p = feature_weights.astype(jnp.float32).reshape(1, D)
    w1_p = jnp.pad(w1.astype(jnp.float32),
                   ((0, 0), (0, h_pad - H))).astype(compute_dtype)
    b1_p = jnp.pad(b1.astype(jnp.float32), (0, h_pad - H)).reshape(1, h_pad)
    w2_p = jnp.pad(w2.astype(jnp.float32) * output_scale,
                   ((0, h_pad - H), (0, 0))).astype(compute_dtype)
    b2_p = (b2.astype(jnp.float32) * output_scale).reshape(1, O)
    return fw_p, w1_p, b1_p, w2_p, b2_p


@functools.partial(jax.jit, static_argnames=("tile_b",))
def predictor_forward(x, fw_p, w1_p, b1_p, w2_p, b2_p, *, tile_b=1024):
    """x: (B, D) f32.  Prepared params from prepare_predictor_params().

    Returns (B, O) f32 logits (Classification head semantics)."""
    B, D = x.shape
    h_pad = w1_p.shape[1]
    O = w2_p.shape[1]

    # --- Batch tiling: large tiles amortize per-grid-step overhead; cap so the
    # grid has >=2 steps when the batch permits (v7x two-TC "parallel" split).
    b_ceil = _round_up(B, _ROW_ALIGN)
    tb = min(tile_b, b_ceil)
    if b_ceil >= 2 * _ROW_ALIGN:
        tb = min(tb, _round_up((b_ceil + 1) // 2, _ROW_ALIGN))
    tb = max(_ROW_ALIGN, _round_up(tb, _ROW_ALIGN))
    b_pad = _round_up(B, tb)

    x_f32 = x.astype(jnp.float32)
    if b_pad != B:
        x_f32 = jnp.pad(x_f32, ((0, b_pad - B), (0, 0)))

    grid = (b_pad // tb,)

    w_itemsize = jnp.dtype(w1_p.dtype).itemsize
    flops = 2 * b_pad * (D * h_pad + h_pad * O)
    bytes_accessed = (b_pad * D * 4                          # x (f32, unpadded D)
                      + (D * h_pad + h_pad * O) * w_itemsize  # weights
                      + (D + h_pad + O) * 4                   # fw + biases
                      + b_pad * O * 4)                        # output (unpadded O)

    # Rough per-step VMEM footprint (double-buffered x/out, resident weights,
    # intermediate activation).  Explicit limit keeps large batch tiles legal
    # under v5e's 16 MiB scoped default and inside v7x's 64 MiB physical VMEM.
    vmem_est = (2 * tb * D * 4 + 2 * tb * O * 4
                + 2 * (D * h_pad + h_pad * O) * w_itemsize
                + 2 * (D + h_pad + O) * 4
                + 2 * tb * h_pad * 4)
    vmem_limit = int(min(max(2 * vmem_est + (4 << 20), 16 << 20), 56 << 20))

    out = pl.pallas_call(
        _predictor_kernel,
        out_shape=jax.ShapeDtypeStruct((b_pad, O), jnp.float32),
        grid=grid,
        in_specs=[
            pl.BlockSpec((tb, D), lambda i: (i, 0)),        # x tile (per step)
            pl.BlockSpec((1, D), lambda i: (0, 0)),         # feature_weights
            pl.BlockSpec((D, h_pad), lambda i: (0, 0)),     # fc1 weight (resident)
            pl.BlockSpec((1, h_pad), lambda i: (0, 0)),     # fc1 bias
            pl.BlockSpec((h_pad, O), lambda i: (0, 0)),     # fc2 weight (resident)
            pl.BlockSpec((1, O), lambda i: (0, 0)),         # fc2 bias
        ],
        out_specs=pl.BlockSpec((tb, O), lambda i: (i, 0)),  # unpadded lane dim
        compiler_params=pltpu.CompilerParams(
            dimension_semantics=("parallel",),
            vmem_limit_bytes=vmem_limit),
        cost_estimate=pl.CostEstimate(flops=flops, transcendentals=0,
                                      bytes_accessed=bytes_accessed),
    )(x_f32, fw_p, w1_p, b1_p, w2_p, b2_p)

    return out[:B] if b_pad != B else out


def reference_forward(x, feature_weights, w1, b1, w2, b2, output_scale=1.0):
    xw = x * feature_weights
    h = jnp.maximum(xw @ w1 + b1, 0.0)
    return (h @ w2 + b2) * output_scale


if __name__ == "__main__":
    # Shapes consistent with the module (Classification head, hidden_size=64).
    B = 8            # batch
    D = 32           # input_size
    H = 64           # hidden_size (module default)
    O = 8            # output_size (num classes)
    output_scale = 1.5

    key = jax.random.PRNGKey(0)
    kx, kfw, kw1, kb1, kw2, kb2 = jax.random.split(key, 6)

    x = jax.random.normal(kx, (B, D), dtype=jnp.float32)
    feature_weights = jax.random.normal(kfw, (D,), dtype=jnp.float32)
    # torch.nn.Linear stores (out, in); we build (in, out) directly.
    w1 = jax.random.normal(kw1, (D, H), dtype=jnp.float32) * 0.1
    b1 = jax.random.normal(kb1, (H,), dtype=jnp.float32) * 0.1
    w2 = jax.random.normal(kw2, (H, O), dtype=jnp.float32) * 0.1
    b2 = jax.random.normal(kb2, (O,), dtype=jnp.float32) * 0.1

    ref = reference_forward(x, feature_weights, w1, b1, w2, b2, output_scale)

    # Strict check: f32 compute path.
    params_f32 = prepare_predictor_params(feature_weights, w1, b1, w2, b2,
                                          output_scale=output_scale,
                                          compute_dtype=jnp.float32)
    out_f32 = jax.block_until_ready(predictor_forward(x, *params_f32))
    assert out_f32.shape == (B, O)
    assert jnp.allclose(out_f32, ref, atol=1e-3, rtol=1e-3), "f32 mismatch vs reference"

    # Fast path: bf16 matmul operands, f32 accumulation (v6e/v7x MXU native);
    # x * feature_weights still computed in f32 before the cast.
    params_bf16 = prepare_predictor_params(feature_weights, w1, b1, w2, b2,
                                           output_scale=output_scale,
                                           compute_dtype=jnp.bfloat16)
    out_bf16 = jax.block_until_ready(predictor_forward(x, *params_bf16))
    assert out_bf16.shape == (B, O)
    assert jnp.allclose(out_bf16, ref, atol=3e-2, rtol=3e-2), "bf16 mismatch vs reference"

    print("KERNEL_OK")
</pallas_src>

<mosaic_0001>
module attributes {stable_mosaic.version = 11 : i64} {
  func.func @_predictor_kernel(%arg0: i32, %arg1: memref<16x32xf32, #tpu.memory_space<vmem>>, %arg2: memref<1x32xf32, #tpu.memory_space<vmem>>, %arg3: memref<32x128xf32, #tpu.memory_space<vmem>>, %arg4: memref<1x128xf32, #tpu.memory_space<vmem>>, %arg5: memref<128x8xf32, #tpu.memory_space<vmem>>, %arg6: memref<1x8xf32, #tpu.memory_space<vmem>>, %arg7: memref<16x8xf32, #tpu.memory_space<vmem>>) attributes {dimension_semantics = [#tpu.dimension_semantics<parallel>], iteration_bounds = array<i64: 1>, scalar_prefetch = 0 : i64, scratch_operands = 0 : i64, tpu.core_type = #tpu.core_type<tc>, window_params = [{transform_indices = @transform_0, window_bounds = array<i64: 16, 32>}, {pipeline_mode = #tpu.pipeline_mode<synchronous>, transform_indices = @transform_1, window_bounds = array<i64: 1, 32>}, {pipeline_mode = #tpu.pipeline_mode<synchronous>, transform_indices = @transform_2, window_bounds = array<i64: 32, 128>}, {pipeline_mode = #tpu.pipeline_mode<synchronous>, transform_indices = @transform_3, window_bounds = array<i64: 1, 128>}, {pipeline_mode = #tpu.pipeline_mode<synchronous>, transform_indices = @transform_4, window_bounds = array<i64: 128, 8>}, {pipeline_mode = #tpu.pipeline_mode<synchronous>, transform_indices = @transform_5, window_bounds = array<i64: 1, 8>}, {transform_indices = @transform_6, window_bounds = array<i64: 16, 8>}]} {
    %c0 = arith.constant 0 : index
    %c0_0 = arith.constant 0 : index
    %0 = vector.load %arg1[%c0, %c0_0] : memref<16x32xf32, #tpu.memory_space<vmem>>, vector<16x32xf32>
    %c0_1 = arith.constant 0 : index
    %c0_2 = arith.constant 0 : index
    %1 = vector.load %arg2[%c0_1, %c0_2] : memref<1x32xf32, #tpu.memory_space<vmem>>, vector<1x32xf32>
    %2 = vector.broadcast %1 : vector<1x32xf32> to vector<16x32xf32>
    %3 = arith.mulf %0, %2 : vector<16x32xf32>
    %c0_3 = arith.constant 0 : index
    %c0_4 = arith.constant 0 : index
    %4 = vector.load %arg3[%c0_3, %c0_4] : memref<32x128xf32, #tpu.memory_space<vmem>>, vector<32x128xf32>
    %cst = arith.constant dense<0.000000e+00> : vector<16x128xf32>
    %5 = tpu.matmul %3, %4, %cst {dimension_numbers = #tpu.dot_dimension_numbers<[1], [0], [0], [1], [0, 0, 1, 1], [], []>} : vector<16x32xf32>, vector<32x128xf32>, vector<16x128xf32> -> vector<16x128xf32>
    %c0_5 = arith.constant 0 : index
    %c0_6 = arith.constant 0 : index
    %6 = vector.load %arg4[%c0_5, %c0_6] : memref<1x128xf32, #tpu.memory_space<vmem>>, vector<1x128xf32>
    %7 = vector.broadcast %6 : vector<1x128xf32> to vector<16x128xf32>
    %8 = arith.addf %5, %7 : vector<16x128xf32>
    %cst_7 = arith.constant 0.000000e+00 : f32
    %9 = vector.broadcast %cst_7 : f32 to vector<16x128xf32>
    %10 = arith.maximumf %8, %9 : vector<16x128xf32>
    %c0_8 = arith.constant 0 : index
    %c0_9 = arith.constant 0 : index
    %11 = vector.load %arg5[%c0_8, %c0_9] : memref<128x8xf32, #tpu.memory_space<vmem>>, vector<128x8xf32>
    %cst_10 = arith.constant dense<0.000000e+00> : vector<16x8xf32>
    %12 = tpu.matmul %10, %11, %cst_10 {dimension_numbers = #tpu.dot_dimension_numbers<[1], [0], [0], [1], [0, 0, 1, 1], [], []>} : vector<16x128xf32>, vector<128x8xf32>, vector<16x8xf32> -> vector<16x8xf32>
    %c0_11 = arith.constant 0 : index
    %c0_12 = arith.constant 0 : index
    %13 = vector.load %arg6[%c0_11, %c0_12] : memref<1x8xf32, #tpu.memory_space<vmem>>, vector<1x8xf32>
    %14 = vector.broadcast %13 : vector<1x8xf32> to vector<16x8xf32>
    %15 = arith.addf %12, %14 : vector<16x8xf32>
    %c0_13 = arith.constant 0 : index
    %c0_14 = arith.constant 0 : index
    %16 = vector.load %arg7[%c0_13, %c0_14] : memref<16x8xf32, #tpu.memory_space<vmem>>, vector<16x8xf32>
    tpu.vector_store %arg7[%c0_13, %c0_14], %15 {strides = array<i32>} : memref<16x8xf32, #tpu.memory_space<vmem>>, vector<16x8xf32>,
    return
  }
  func.func @transform_0(%arg0: i32) -> (i32, i32) {
    %c0_i32 = arith.constant 0 : i32
    %c0_i32_0 = arith.constant 0 : i32
    return %arg0, %c0_i32 : i32, i32
  }
  func.func @transform_1(%arg0: i32) -> (i32, i32) {
    %c0_i32 = arith.constant 0 : i32
    %c0_i32_0 = arith.constant 0 : i32
    %c0_i32_1 = arith.constant 0 : i32
    return %c0_i32, %c0_i32_0 : i32, i32
  }
  func.func @transform_2(%arg0: i32) -> (i32, i32) {
    %c0_i32 = arith.constant 0 : i32
    %c0_i32_0 = arith.constant 0 : i32
    %c0_i32_1 = arith.constant 0 : i32
    return %c0_i32, %c0_i32_0 : i32, i32
  }
  func.func @transform_3(%arg0: i32) -> (i32, i32) {
    %c0_i32 = arith.constant 0 : i32
    %c0_i32_0 = arith.constant 0 : i32
    %c0_i32_1 = arith.constant 0 : i32
    return %c0_i32, %c0_i32_0 : i32, i32
  }
  func.func @transform_4(%arg0: i32) -> (i32, i32) {
    %c0_i32 = arith.constant 0 : i32
    %c0_i32_0 = arith.constant 0 : i32
    %c0_i32_1 = arith.constant 0 : i32
    return %c0_i32, %c0_i32_0 : i32, i32
  }
  func.func @transform_5(%arg0: i32) -> (i32, i32) {
    %c0_i32 = arith.constant 0 : i32
    %c0_i32_0 = arith.constant 0 : i32
    %c0_i32_1 = arith.constant 0 : i32
    return %c0_i32, %c0_i32_0 : i32, i32
  }
  func.func @transform_6(%arg0: i32) -> (i32, i32) {
    %c0_i32 = arith.constant 0 : i32
    %c0_i32_0 = arith.constant 0 : i32
    return %arg0, %c0_i32 : i32, i32
  }
}

</mosaic_0001>

<llo_original>
// kernel: predictor_forward.1
$region0: #{predictor_forward.1}
  #allocation0 [shape = 'u32[]', space=smem, size = 0x4, offset = 0x4, fixed_abs, tag = 'smem constant byte address 0x4 - core index']
  #allocation1 [shape = 'u32[144,128]{1,0:T(1,128)}', space=vmem, size = 0x12000, scoped, tag = 'internal scratch']
  %s0 = inlined_call_operand.vmem [shape: f32[16,32], index: 0, kind: input, shape index: {}]
  %s1 = inlined_call_operand.vmem [shape: f32[1,32], index: 1, kind: input, shape index: {}]
  %s2 = inlined_call_operand.vmem [shape: f32[32,128], index: 2, kind: input, shape index: {}]
  %s3 = inlined_call_operand.vmem [shape: f32[1,128], index: 3, kind: input, shape index: {}]
  %s4 = inlined_call_operand.vmem [shape: f32[128,8], index: 4, kind: input, shape index: {}]
  %s5 = inlined_call_operand.vmem [shape: f32[1,8], index: 5, kind: input, shape index: {}]
  %s6 = inlined_call_operand.vmem [shape: f32[16,8], index: 6, kind: output, shape index: {}]
  %s7 = sld [smem:[#allocation0]]
  $region34: #{predictor_forward.1} parent=0
    _
  %s9 = ssub.s32 1, %s7
  %s10 = scalar_select 0, %s9, %s7
  // Predicated region
  $region2: #{predictor_forward.1} parent=0 // pred_check
    _
  $region3: #{predictor_forward.1} parent=0 // pred_check_branch
    %12 = sbr.rel (0) target = $region5
  $region4: #{predictor_forward.1} parent=0 // pred_region
    _
  $region5: #{predictor_forward.1} parent=0 // pred_fallthru
    _
  // Predicated region
  $region6: #{predictor_forward.1} parent=0 // pred_check
    _
  $region7: #{predictor_forward.1} parent=0 // pred_check_branch
    %14 = sbr.rel (0) target = $region9
  $region8: #{predictor_forward.1} parent=0 // pred_region
    _
  $region9: #{predictor_forward.1} parent=0 // pred_fallthru
    _
  // Predicated region
  $region10: #{predictor_forward.1} parent=0 // pred_check
    _
  $region11: #{predictor_forward.1} parent=0 // pred_check_branch
    %16 = sbr.rel (0) target = $region13
  $region12: #{predictor_forward.1} parent=0 // pred_region
    _
  $region13: #{predictor_forward.1} parent=0 // pred_fallthru
    _
  // Predicated region
  $region14: #{predictor_forward.1} parent=0 // pred_check
    _
  $region15: #{predictor_forward.1} parent=0 // pred_check_branch
    %18 = sbr.rel (0) target = $region17
  $region16: #{predictor_forward.1} parent=0 // pred_region
    _
  $region17: #{predictor_forward.1} parent=0 // pred_fallthru
    _
  // Predicated region
  $region18: #{predictor_forward.1} parent=0 // pred_check
    _
  $region19: #{predictor_forward.1} parent=0 // pred_check_branch
    %20 = sbr.rel (0) target = $region21
  $region20: #{predictor_forward.1} parent=0 // pred_region
    _
  $region21: #{predictor_forward.1} parent=0 // pred_fallthru
    _
  // Predicated region
  $region22: #{predictor_forward.1} parent=0 // pred_check
    _
  $region23: #{predictor_forward.1} parent=0 // pred_check_branch
    %22 = sbr.rel (0) target = $region25
  $region24: #{predictor_forward.1} parent=0 // pred_region
    _
  $region25: #{predictor_forward.1} parent=0 // pred_fallthru
    _
  %v23 = vld [vmem:[%s0] sm:$0xff]
  %v24 = vld [vmem:[%s0 + $0x8] sm:$0xff]
  %v25 = vld [vmem:[%s1] sm:$0x1]
  %v27 = vlaneseq
  %v28 = vshrl.u32 %v27, 7
  %v29 = vsub.s32 0, %v28
  %v30 = vrot.slane %v25, %v29
  %v32 = vmul.f32 %v23, %v30
  %v33 = vmul.f32 %v24, %v30
  %v34 = vld [vmem:[%s2] sm:$0xff]
  %v35 = vld [vmem:[%s2 + $0x8] sm:$0xff]
  %v36 = vld [vmem:[%s2 + $0x10] sm:$0xff]
  %v37 = vld [vmem:[%s2 + $0x18] sm:$0xff]
  %v38 = vld [vmem:[%s3] sm:$0x1]
  %v40 = vlaneseq
  %v41 = vshrl.u32 %v40, 7
  %v42 = vsub.s32 0, %v41
  %v43 = vrot.slane %v38, %v42
  %vm45 = vcmask 261120
  %v47 = vsel %vm45, %v32, 0
  %v50 = vsel %vm45, %v33, 0
  %52 = vmatprep.subr.mxu0 0.0
  %53 = vmatpush1.msra.mxu0 %v34
  %54 = vmatprep.subr.mxu0 0.0
  %55 = vmatpush1.msra.mxu0 %v35
  %56 = vmatprep.subr.mxu0 0.0
  %57 = vmatpush1.msra.mxu0 %v36
  %58 = vmatprep.subr.mxu0 0.0
  %59 = vmatpush1.msra.mxu0 %v37
  %60 = vmatprep.subr.mxu0 0.0
  %61 = vmatpush1.msra.mxu0 0.0
  %62 = vmatprep.subr.mxu0 0.0
  %63 = vmatpush1.msra.mxu0 0.0
  %64 = vmatprep.subr.mxu0 0.0
  %65 = vmatpush1.msra.mxu0 0.0
  %66 = vmatprep.subr.mxu0 0.0
  %67 = vmatpush1.msra.mxu0 0.0
  %68 = vmatprep.subr.mxu0 0.0
  %69 = vmatpush1.msra.mxu0 0.0
  %70 = vmatprep.subr.mxu0 0.0
  %71 = vmatpush1.msra.mxu0 0.0
  %72 = vmatprep.subr.mxu0 0.0
  %73 = vmatpush1.msra.mxu0 0.0
  %74 = vmatprep.subr.mxu0 0.0
  %75 = vmatpush1.msra.mxu0 0.0
  %76 = vmatprep.subr.mxu0 0.0
  %77 = vmatpush1.msra.mxu0 0.0
  %78 = vmatprep.subr.mxu0 0.0
  %79 = vmatpush1.msra.mxu0 0.0
  %80 = vmatprep.subr.mxu0 0.0
  %81 = vmatpush1.msra.mxu0 0.0
  %82 = vmatprep.subr.mxu0 0.0
  %83 = vmatpush1.msra.mxu0 0.0
  %84 = vmatprep.subr.mxu0 0.0
  %85 = vmatpush1.msra.mxu0 0.0
  %86 = vmatprep.subr.mxu0 0.0
  %87 = vmatpush1.msra.mxu0 0.0
  %88 = vmatprep.subr.mxu0 0.0
  %89 = vmatpush1.msra.mxu0 0.0
  %90 = vmatprep.subr.mxu0 0.0
  %91 = vmatpush1.msra.mxu0 0.0
  %92 = vmatprep.subr.mxu0 0.0
  %93 = vmatpush1.msra.mxu0 0.0
  %94 = vmatprep.subr.mxu0 0.0
  %95 = vmatpush1.msra.mxu0 0.0
  %96 = vmatprep.subr.mxu0 0.0
  %97 = vmatpush1.msra.mxu0 0.0
  %98 = vmatprep.subr.mxu0 0.0
  %99 = vmatpush1.msra.mxu0 0.0
  %100 = vmatprep.subr.mxu0 0.0
  %101 = vmatpush1.msra.mxu0 0.0
  %102 = vmatprep.subr.mxu0 0.0
  %103 = vmatpush1.msra.mxu0 0.0
  %104 = vmatprep.subr.mxu0 0.0
  %105 = vmatpush1.msra.mxu0 0.0
  %106 = vmatprep.subr.mxu0 0.0
  %107 = vmatpush1.msra.mxu0 0.0
  %108 = vmatprep.subr.mxu0 0.0
  %109 = vmatpush1.msra.mxu0 0.0
  %110 = vmatprep.subr.mxu0 0.0
  %111 = vmatpush1.msra.mxu0 0.0
  %112 = vmatprep.subr.mxu0 0.0
  %113 = vmatpush1.msra.mxu0 0.0
  %114 = vmatprep.subr.mxu0 0.0
  %115 = vmatpush1.msra.mxu0 0.0
  %116 = vmatprep.mubr.f32.mxu0 0.0
  %117 = vmatmul.mubr.f32.gmra.mrb[0].mxu0 %v47
  %v118 = vpop.f32.mrb[0].mxu0
  %v119 = vadd.f32 %v43, %v118
  %v120 = vpop.f32.mrb[0].mxu0
  %121 = vmatprep.mubr.f32.mxu0 0.0
  %122 = vmatmul.mubr.f32.gmra.mrb[0].mxu0 %v50
  %v123 = vpop.f32.mrb[0].mxu0
  %v124 = vadd.f32 %v43, %v123
  %v125 = vpop.f32.mrb[0].mxu0
  %126 = vdwg.mxu0
  %v127 = vmax.f32 %v119, 0.0
  %v128 = vmax.f32 %v124, 0.0
  %v129 = vld [vmem:[%s4] sm:$0xff]
  %v130 = vld [vmem:[%s4 + $0x8] sm:$0xff]
  %v131 = vld [vmem:[%s4 + $0x10] sm:$0xff]
  %v132 = vld [vmem:[%s4 + $0x18] sm:$0xff]
  %v133 = vld [vmem:[%s4 + $0x20] sm:$0xff]
  %v134 = vld [vmem:[%s4 + $0x28] sm:$0xff]
  %v135 = vld [vmem:[%s4 + $0x30] sm:$0xff]
  %v136 = vld [vmem:[%s4 + $0x38] sm:$0xff]
  %v137 = vld [vmem:[%s4 + $0x40] sm:$0xff]
  %v138 = vld [vmem:[%s4 + $0x48] sm:$0xff]
  %v139 = vld [vmem:[%s4 + $0x50] sm:$0xff]
  %v140 = vld [vmem:[%s4 + $0x58] sm:$0xff]
  %v141 = vld [vmem:[%s4 + $0x60] sm:$0xff]
  %v142 = vld [vmem:[%s4 + $0x68] sm:$0xff]
  %v143 = vld [vmem:[%s4 + $0x70] sm:$0xff]
  %v144 = vld [vmem:[%s4 + $0x78] sm:$0xff]
  %v145 = vld [vmem:[%s5] sm:$0x1]
  %v147 = vlaneseq
  %v148 = vshrl.u32 %v147, 7
  %v149 = vsub.s32 0, %v148
  %v150 = vrot.slane %v145, %v149
  %152 = vmatprep.subr.mxu0 0.0
  %153 = vmatpush1.msra.mxu0 %v129
  %154 = vmatprep.subr.mxu0 0.0
  %155 = vmatpush1.msra.mxu0 %v130
  %156 = vmatprep.subr.mxu0 0.0
  %157 = vmatpush1.msra.mxu0 %v131
  %158 = vmatprep.subr.mxu0 0.0
  %159 = vmatpush1.msra.mxu0 %v132
  %160 = vmatprep.subr.mxu0 0.0
  %161 = vmatpush1.msra.mxu0 %v133
  %162 = vmatprep.subr.mxu0 0.0
  %163 = vmatpush1.msra.mxu0 %v134
  %164 = vmatprep.subr.mxu0 0.0
  %165 = vmatpush1.msra.mxu0 %v135
  %166 = vmatprep.subr.mxu0 0.0
  %167 = vmatpush1.msra.mxu0 %v136
  %168 = vmatprep.subr.mxu0 0.0
  %169 = vmatpush1.msra.mxu0 %v137
  %170 = vmatprep.subr.mxu0 0.0
  %171 = vmatpush1.msra.mxu0 %v138
  %172 = vmatprep.subr.mxu0 0.0
  %173 = vmatpush1.msra.mxu0 %v139
  %174 = vmatprep.subr.mxu0 0.0
  %175 = vmatpush1.msra.mxu0 %v140
  %176 = vmatprep.subr.mxu0 0.0
  %177 = vmatpush1.msra.mxu0 %v141
  %178 = vmatprep.subr.mxu0 0.0
  %179 = vmatpush1.msra.mxu0 %v142
  %180 = vmatprep.subr.mxu0 0.0
  %181 = vmatpush1.msra.mxu0 %v143
  %182 = vmatprep.subr.mxu0 0.0
  %183 = vmatpush1.msra.mxu0 %v144
  %184 = vmatprep.subr.mxu0 0.0
  %185 = vmatpush1.msra.mxu0 0.0
  %186 = vmatprep.subr.mxu0 0.0
  %187 = vmatpush1.msra.mxu0 0.0
  %188 = vmatprep.subr.mxu0 0.0
  %189 = vmatpush1.msra.mxu0 0.0
  %190 = vmatprep.subr.mxu0 0.0
  %191 = vmatpush1.msra.mxu0 0.0
  %192 = vmatprep.subr.mxu0 0.0
  %193 = vmatpush1.msra.mxu0 0.0
  %194 = vmatprep.subr.mxu0 0.0
  %195 = vmatpush1.msra.mxu0 0.0
  %196 = vmatprep.subr.mxu0 0.0
  %197 = vmatpush1.msra.mxu0 0.0
  %198 = vmatprep.subr.mxu0 0.0
  %199 = vmatpush1.msra.mxu0 0.0
  %200 = vmatprep.subr.mxu0 0.0
  %201 = vmatpush1.msra.mxu0 0.0
  %202 = vmatprep.subr.mxu0 0.0
  %203 = vmatpush1.msra.mxu0 0.0
  %204 = vmatprep.subr.mxu0 0.0
  %205 = vmatpush1.msra.mxu0 0.0
  %206 = vmatprep.subr.mxu0 0.0
  %207 = vmatpush1.msra.mxu0 0.0
  %208 = vmatprep.subr.mxu0 0.0
  %209 = vmatpush1.msra.mxu0 0.0
  %210 = vmatprep.subr.mxu0 0.0
  %211 = vmatpush1.msra.mxu0 0.0
  %212 = vmatprep.subr.mxu0 0.0
  %213 = vmatpush1.msra.mxu0 0.0
  %214 = vmatprep.subr.mxu0 0.0
  %215 = vmatpush1.msra.mxu0 0.0
  %216 = vmatprep.mubr.f32.mxu0 0.0
  %217 = vmatmul.mubr.f32.gmra.mrb[0].mxu0 %v127
  %v218 = vpop.f32.mrb[0].mxu0
  %v219 = vadd.f32 %v150, %v218
  %v220 = vpop.f32.mrb[0].mxu0
  %221 = vmatprep.mubr.f32.mxu0 0.0
  %222 = vmatmul.mubr.f32.gmra.mrb[0].mxu0 %v128
  %v223 = vpop.f32.mrb[0].mxu0
  %v224 = vadd.f32 %v150, %v223
  %v225 = vpop.f32.mrb[0].mxu0
  %226 = vdwg.mxu0
  %vm227 = vcmask 64512
  %228 = vst.msk [vmem:[%s6] sm:$0xff] %vm227, %v219
  %229 = vst.msk [vmem:[%s6 + $0x8] sm:$0xff] %vm227, %v224
  // Predicated region
  $region26: #{predictor_forward.1} parent=0 // pred_check
    _
  $region27: #{predictor_forward.1} parent=0 // pred_check_branch
    %231 = sbr.rel (0) target = $region29
  $region28: #{predictor_forward.1} parent=0 // pred_region
    _
  $region29: #{predictor_forward.1} parent=0 // pred_fallthru
    _
  // Predicated region
  $region30: #{predictor_forward.1} parent=0 // pred_check
    _
  $region31: #{predictor_forward.1} parent=0 // pred_check_branch
    %233 = sbr.rel (0) target = $region33
  $region32: #{predictor_forward.1} parent=0 // pred_region
    _
  $region33: #{predictor_forward.1} parent=0 // pred_fallthru
    _

</llo_original>
